<compile_context>
chip_gen: v5e
topology: v5e:2x2
jax: 0.10.0
libtpu: 0.0.40
codegen_flags: <defaults>
</compile_context>

<pallas_src>
import jax
import jax.numpy as jnp
from jax.experimental import pallas as pl
from jax.experimental.pallas import tpu as pltpu


def _h_swish(x):
    # x * relu6(x + 3) / 6
    return x * (jnp.clip(x + 3.0, 0.0, 6.0) * (1.0 / 6.0))


def coordatt_kernel(x_ref, w1_ref, b1_ref, wh_ref, bh_ref, ww_ref, bw_ref,
                    ph_ref, pw_ref, eh_ref, ew_ref, o_ref):
    """One grid step processes a (batch_block*C, HW_pad) slab.

    All operands are plain 2-D tiles; conv weights arrive pre-block-diagonalized
    (kron(I_batch_block, W)) so the whole step is batched 2-D matmuls plus
    lane-dense elementwise work — no loops, no reshapes, no concat/slice.
    """
    x = x_ref[...]                                                    # (R, HWp)

    # Adaptive average pools as batched MXU matmuls (M = R rows).
    x_h = jnp.dot(x, ph_ref[...], preferred_element_type=jnp.float32)  # (R, H)
    x_w = jnp.dot(x, pw_ref[...], preferred_element_type=jnp.float32)  # (R, W)

    # conv1 (1x1, BN folded) + h_swish — block-diagonal channel mixing,
    # applied to both branches separately (identical to conv on the concat).
    w1 = w1_ref[...]
    b1 = b1_ref[...]
    y_h = _h_swish(jnp.dot(w1, x_h, preferred_element_type=jnp.float32) + b1)
    y_w = _h_swish(jnp.dot(w1, x_w, preferred_element_type=jnp.float32) + b1)

    # conv_h / conv_w (1x1) + sigmoid.
    a_h = jax.nn.sigmoid(
        jnp.dot(wh_ref[...], y_h, preferred_element_type=jnp.float32) + bh_ref[...])
    a_w = jax.nn.sigmoid(
        jnp.dot(ww_ref[...], y_w, preferred_element_type=jnp.float32) + bw_ref[...])

    # Broadcast the attention maps back over HW on the MXU, fuse the multiply,
    # and store fully lane-dense.
    attn = (jnp.dot(a_h, eh_ref[...], preferred_element_type=jnp.float32) *
            jnp.dot(a_w, ew_ref[...], preferred_element_type=jnp.float32))  # (R, HWp)
    o_ref[...] = x * attn


def _vmem_capacity_bytes():
    try:
        return int(pltpu.get_tpu_info().vmem_capacity_bytes)
    except Exception:
        return 64 << 20          # conservative: v7x per-TensorCore VMEM


def _num_tensorcores():
    try:
        return max(1, int(getattr(jax.devices()[0], "num_cores", 1)))
    except Exception:
        return 1


def _pick_batch_block(n, c, per_sample_bytes, *, vmem_budget, const_floor_bytes,
                      prefer_multi_step, target_tile_bytes=8 << 20, max_rows=256):
    """Choose samples per grid step.

    Preferences (in order): divides N; batch_block*C is a multiple of 8 (or the
    whole array) for sublane-dense tiles; double-buffered in+out (+ constants)
    fit the VMEM budget; x tile <= ~target_tile_bytes (HBM-bound kernel — big
    tiles amortize the ~0.35us/step overhead) with batch_block*C <= max_rows
    (block-diagonal conv weights grow as batch_block**2; 256 rows already fills
    a 256-wide MXU); on multi-TC chips prefer >=2 (even) grid steps so the
    parallel grid axis can be sharded, on 1-TC chips prefer fewest/largest.
    """
    divisors = [d for d in range(1, n + 1) if n % d == 0]

    def aligned(d):
        return (d * c) % 8 == 0 or d == n

    def fits_vmem(d):
        # ~4 buffers for double-buffered in+out, ~2 tiles of live intermediates,
        # plus constants and headroom.
        return (6 * d * per_sample_bytes + 2 * const_floor_bytes + (4 << 20)
                <= vmem_budget)

    cands = [d for d in divisors if aligned(d) and fits_vmem(d)]
    if not cands:
        al = [d for d in divisors if aligned(d)]
        return min(al) if al else n

    good = [d for d in cands
            if d * per_sample_bytes <= target_tile_bytes and d * c <= max_rows]
    if not good:
        good = [min(cands)]

    if prefer_multi_step:
        even = [d for d in good if (n // d) >= 2 and (n // d) % 2 == 0]
        multi = [d for d in good if (n // d) >= 2]
        if even:
            return max(even)
        if multi:
            return max(multi)
    return max(good)


def coord_att_pallas(x, params, *, batch_block=None):
    N, C, H, W = x.shape
    w1, b1, scale, shift, wh, bh, ww, bw = params
    oup = wh.shape[0]
    assert oup == C, "CoordAtt requires oup == inp for the final broadcast multiply"

    hw = H * W
    hw_pad = max(128, -(-hw // 128) * 128)        # lane-dense HW (pad with zeros)

    # --- fold inference BatchNorm + conv1 bias into the conv1 weight/bias ---
    w1f = (scale * w1).astype(jnp.float32)                   # (mip, C)
    b1f = (scale * b1 + shift).astype(jnp.float32)           # (mip, 1)

    # --- pooling / expansion matrices for the padded flat-HW layout ---------
    pos = jnp.arange(hw_pad, dtype=jnp.int32)
    valid = pos < hw
    rows = jnp.where(valid, pos // W, -1)         # pad positions match nothing
    cols = jnp.where(valid, pos % W, -1)
    eh = (rows[None, :] == jnp.arange(H, dtype=jnp.int32)[:, None]).astype(jnp.float32)  # (H, HWp)
    ew = (cols[None, :] == jnp.arange(W, dtype=jnp.int32)[:, None]).astype(jnp.float32)  # (W, HWp)
    ph = eh.T * (1.0 / W)                         # (HWp, H): mean over W
    pw = ew.T * (1.0 / H)                         # (HWp, W): mean over H
    pool_const_bytes = 4 * (eh.size + ew.size + ph.size + pw.size)

    # --- chip-aware tile selection ------------------------------------------
    vmem_phys = _vmem_capacity_bytes()
    per_sample_bytes = C * hw_pad * 4
    if batch_block is None:
        batch_block = _pick_batch_block(
            N, C, per_sample_bytes,
            vmem_budget=int(0.7 * vmem_phys),
            const_floor_bytes=pool_const_bytes,
            prefer_multi_step=(_num_tensorcores() >= 2))
    assert N % batch_block == 0, "batch_block must divide N"
    grid_n = N // batch_block
    rows_blk = batch_block * C

    # --- block-diagonal conv weights / tiled biases (single 2-D matmuls) ----
    eye = jnp.eye(batch_block, dtype=jnp.float32)
    w1b = jnp.kron(eye, w1f)                                   # (nb*mip, nb*C)
    b1b = jnp.tile(b1f, (batch_block, 1))                      # (nb*mip, 1)
    whb = jnp.kron(eye, wh.astype(jnp.float32))                # (nb*oup, nb*mip)
    bhb = jnp.tile(bh.astype(jnp.float32), (batch_block, 1))   # (nb*oup, 1)
    wwb = jnp.kron(eye, ww.astype(jnp.float32))
    bwb = jnp.tile(bw.astype(jnp.float32), (batch_block, 1))

    # --- flatten + pad x to a 2-D (N*C, HW_pad) slab -------------------------
    xf = x.reshape(N, C, hw).astype(jnp.float32)
    if hw_pad != hw:
        xf = jnp.pad(xf, ((0, 0), (0, 0), (0, hw_pad - hw)))
    x2d = xf.reshape(N * C, hw_pad)

    # --- explicit VMEM budget (v5e scoped default is 16 MiB; v7x phys 64 MiB) -
    tile_bytes = rows_blk * hw_pad * 4
    const_bytes = pool_const_bytes + 4 * (w1b.size + b1b.size + whb.size +
                                          bhb.size + wwb.size + bwb.size)
    vmem_need = 6 * tile_bytes + 2 * const_bytes + (2 << 20)
    vmem_limit = int(min(max(vmem_need + (2 << 20), 32 << 20),
                         int(0.9 * vmem_phys)))

    def _full(arr):
        return pl.BlockSpec(arr.shape, lambda i: (0, 0))

    out2d = pl.pallas_call(
        coordatt_kernel,
        out_shape=jax.ShapeDtypeStruct((N * C, hw_pad), jnp.float32),
        grid=(grid_n,),
        in_specs=[
            pl.BlockSpec((rows_blk, hw_pad), lambda i: (i, 0)),   # x slab
            _full(w1b), _full(b1b),     # conv1 weight / bias (BN folded, blk-diag)
            _full(whb), _full(bhb),     # conv_h weight / bias (blk-diag)
            _full(wwb), _full(bwb),     # conv_w weight / bias (blk-diag)
            _full(ph), _full(pw),       # pooling matrices
            _full(eh), _full(ew),       # expansion matrices
        ],
        out_specs=pl.BlockSpec((rows_blk, hw_pad), lambda i: (i, 0)),
        compiler_params=pltpu.CompilerParams(
            dimension_semantics=("parallel",),
            vmem_limit_bytes=vmem_limit),
    )(x2d, w1b, b1b, whb, bhb, wwb, bwb, ph, pw, eh, ew)

    out = out2d.reshape(N, C, hw_pad)[:, :, :hw]
    return out.reshape(N, C, H, W)


def coord_att_reference(x, params):
    """Pure-JAX reference of the PyTorch forward (inference-mode BN)."""
    w1, b1, scale, shift, wh, bh, ww, bw = params
    N, C, H, W = x.shape
    x_h = jnp.mean(x, axis=3)                        # (N, C, H)
    x_w = jnp.mean(x, axis=2)                        # (N, C, W)
    y = jnp.concatenate([x_h, x_w], axis=2)          # (N, C, H+W)
    y = jnp.einsum("mc,ncl->nml", w1, y) + b1[None]  # (N, mip, H+W)
    y = y * scale[None] + shift[None]
    y = y * (jnp.clip(y + 3.0, 0.0, 6.0) / 6.0)
    yh, yw = y[:, :, :H], y[:, :, H:]
    a_h = jax.nn.sigmoid(jnp.einsum("om,nml->nol", wh, yh) + bh[None])  # (N, oup, H)
    a_w = jax.nn.sigmoid(jnp.einsum("om,nml->nol", ww, yw) + bw[None])  # (N, oup, W)
    return x * a_w[:, :, None, :] * a_h[:, :, :, None]


def make_params(key, inp, oup, reduction=32):
    mip = max(8, inp // reduction)
    ks = jax.random.split(key, 8)
    w1 = jax.random.normal(ks[0], (mip, inp), jnp.float32) * 0.1
    b1 = jax.random.normal(ks[1], (mip, 1), jnp.float32) * 0.1
    gamma = 1.0 + 0.1 * jax.random.normal(ks[2], (mip, 1), jnp.float32)
    beta = 0.1 * jax.random.normal(ks[3], (mip, 1), jnp.float32)
    run_mean = 0.1 * jax.random.normal(ks[4], (mip, 1), jnp.float32)
    run_var = jnp.abs(1.0 + 0.1 * jax.random.normal(ks[5], (mip, 1), jnp.float32))
    eps = 1e-5
    scale = gamma / jnp.sqrt(run_var + eps)          # fold BN into scale/shift
    shift = beta - run_mean * scale
    wh = jax.random.normal(ks[6], (oup, mip), jnp.float32) * 0.1
    bh = jnp.zeros((oup, 1), jnp.float32)
    ww = jax.random.normal(ks[7], (oup, mip), jnp.float32) * 0.1
    bw = jnp.zeros((oup, 1), jnp.float32)
    return (w1, b1, scale, shift, wh, bh, ww, bw)


if __name__ == "__main__":
    key = jax.random.PRNGKey(0)
    kx, kp = jax.random.split(key)

    N, C, H, W = 2, 4, 16, 16          # inp = oup = 4, mip = max(8, 4//32) = 8
    x = jax.random.normal(kx, (N, C, H, W), jnp.float32)
    params = make_params(kp, inp=C, oup=C, reduction=32)

    out = coord_att_pallas(x, params)
    out = jax.block_until_ready(out)

    ref = coord_att_reference(x, params)
    assert out.shape == (N, C, H, W)
    assert jnp.allclose(out, ref, atol=1e-5, rtol=1e-5), "mismatch vs reference"

    print("KERNEL_OK")
</pallas_src>

<mosaic_0001>
module attributes {stable_mosaic.version = 11 : i64} {
  func.func @coordatt_kernel(%arg0: i32, %arg1: memref<8x256xf32, #tpu.memory_space<vmem>>, %arg2: memref<16x8xf32, #tpu.memory_space<vmem>>, %arg3: memref<16x1xf32, #tpu.memory_space<vmem>>, %arg4: memref<8x16xf32, #tpu.memory_space<vmem>>, %arg5: memref<8x1xf32, #tpu.memory_space<vmem>>, %arg6: memref<8x16xf32, #tpu.memory_space<vmem>>, %arg7: memref<8x1xf32, #tpu.memory_space<vmem>>, %arg8: memref<256x16xf32, #tpu.memory_space<vmem>>, %arg9: memref<256x16xf32, #tpu.memory_space<vmem>>, %arg10: memref<16x256xf32, #tpu.memory_space<vmem>>, %arg11: memref<16x256xf32, #tpu.memory_space<vmem>>, %arg12: memref<8x256xf32, #tpu.memory_space<vmem>>) attributes {dimension_semantics = [#tpu.dimension_semantics<parallel>], iteration_bounds = array<i64: 1>, scalar_prefetch = 0 : i64, scratch_operands = 0 : i64, tpu.core_type = #tpu.core_type<tc>, window_params = [{transform_indices = @transform_0, window_bounds = array<i64: 8, 256>}, {pipeline_mode = #tpu.pipeline_mode<synchronous>, transform_indices = @transform_1, window_bounds = array<i64: 16, 8>}, {pipeline_mode = #tpu.pipeline_mode<synchronous>, transform_indices = @transform_2, window_bounds = array<i64: 16, 1>}, {pipeline_mode = #tpu.pipeline_mode<synchronous>, transform_indices = @transform_3, window_bounds = array<i64: 8, 16>}, {pipeline_mode = #tpu.pipeline_mode<synchronous>, transform_indices = @transform_4, window_bounds = array<i64: 8, 1>}, {pipeline_mode = #tpu.pipeline_mode<synchronous>, transform_indices = @transform_5, window_bounds = array<i64: 8, 16>}, {pipeline_mode = #tpu.pipeline_mode<synchronous>, transform_indices = @transform_6, window_bounds = array<i64: 8, 1>}, {pipeline_mode = #tpu.pipeline_mode<synchronous>, transform_indices = @transform_7, window_bounds = array<i64: 256, 16>}, {pipeline_mode = #tpu.pipeline_mode<synchronous>, transform_indices = @transform_8, window_bounds = array<i64: 256, 16>}, {pipeline_mode = #tpu.pipeline_mode<synchronous>, transform_indices = @transform_9, window_bounds = array<i64: 16, 256>}, {pipeline_mode = #tpu.pipeline_mode<synchronous>, transform_indices = @transform_10, window_bounds = array<i64: 16, 256>}, {transform_indices = @transform_11, window_bounds = array<i64: 8, 256>}]} {
    %c0 = arith.constant 0 : index
    %c0_0 = arith.constant 0 : index
    %0 = vector.load %arg1[%c0, %c0_0] : memref<8x256xf32, #tpu.memory_space<vmem>>, vector<8x256xf32>
    %c0_1 = arith.constant 0 : index
    %c0_2 = arith.constant 0 : index
    %1 = vector.load %arg8[%c0_1, %c0_2] : memref<256x16xf32, #tpu.memory_space<vmem>>, vector<256x16xf32>
    %cst = arith.constant dense<0.000000e+00> : vector<8x16xf32>
    %2 = tpu.matmul %0, %1, %cst {dimension_numbers = #tpu.dot_dimension_numbers<[1], [0], [0], [1], [0, 0, 1, 1], [], []>} : vector<8x256xf32>, vector<256x16xf32>, vector<8x16xf32> -> vector<8x16xf32>
    %c0_3 = arith.constant 0 : index
    %c0_4 = arith.constant 0 : index
    %3 = vector.load %arg9[%c0_3, %c0_4] : memref<256x16xf32, #tpu.memory_space<vmem>>, vector<256x16xf32>
    %cst_5 = arith.constant dense<0.000000e+00> : vector<8x16xf32>
    %4 = tpu.matmul %0, %3, %cst_5 {dimension_numbers = #tpu.dot_dimension_numbers<[1], [0], [0], [1], [0, 0, 1, 1], [], []>} : vector<8x256xf32>, vector<256x16xf32>, vector<8x16xf32> -> vector<8x16xf32>
    %c0_6 = arith.constant 0 : index
    %c0_7 = arith.constant 0 : index
    %5 = vector.load %arg2[%c0_6, %c0_7] : memref<16x8xf32, #tpu.memory_space<vmem>>, vector<16x8xf32>
    %c0_8 = arith.constant 0 : index
    %c0_9 = arith.constant 0 : index
    %6 = vector.load %arg3[%c0_8, %c0_9] : memref<16x1xf32, #tpu.memory_space<vmem>>, vector<16x1xf32>
    %cst_10 = arith.constant dense<0.000000e+00> : vector<16x16xf32>
    %7 = tpu.matmul %5, %2, %cst_10 {dimension_numbers = #tpu.dot_dimension_numbers<[1], [0], [0], [1], [0, 0, 1, 1], [], []>} : vector<16x8xf32>, vector<8x16xf32>, vector<16x16xf32> -> vector<16x16xf32>
    %8 = vector.broadcast %6 : vector<16x1xf32> to vector<16x16xf32>
    %9 = arith.addf %7, %8 : vector<16x16xf32>
    %cst_11 = arith.constant 3.000000e+00 : f32
    %10 = vector.broadcast %cst_11 : f32 to vector<16x16xf32>
    %11 = arith.addf %9, %10 : vector<16x16xf32>
    %cst_12 = arith.constant 0.000000e+00 : f32
    %cst_13 = arith.constant 6.000000e+00 : f32
    %12 = vector.broadcast %cst_12 : f32 to vector<16x16xf32>
    %13 = arith.maximumf %12, %11 : vector<16x16xf32>
    %14 = vector.broadcast %cst_13 : f32 to vector<16x16xf32>
    %15 = arith.minimumf %14, %13 : vector<16x16xf32>
    %cst_14 = arith.constant 0.166666672 : f32
    %16 = vector.broadcast %cst_14 : f32 to vector<16x16xf32>
    %17 = arith.mulf %15, %16 : vector<16x16xf32>
    %18 = arith.mulf %9, %17 : vector<16x16xf32>
    %cst_15 = arith.constant dense<0.000000e+00> : vector<16x16xf32>
    %19 = tpu.matmul %5, %4, %cst_15 {dimension_numbers = #tpu.dot_dimension_numbers<[1], [0], [0], [1], [0, 0, 1, 1], [], []>} : vector<16x8xf32>, vector<8x16xf32>, vector<16x16xf32> -> vector<16x16xf32>
    %20 = vector.broadcast %6 : vector<16x1xf32> to vector<16x16xf32>
    %21 = arith.addf %19, %20 : vector<16x16xf32>
    %cst_16 = arith.constant 3.000000e+00 : f32
    %22 = vector.broadcast %cst_16 : f32 to vector<16x16xf32>
    %23 = arith.addf %21, %22 : vector<16x16xf32>
    %cst_17 = arith.constant 0.000000e+00 : f32
    %cst_18 = arith.constant 6.000000e+00 : f32
    %24 = vector.broadcast %cst_17 : f32 to vector<16x16xf32>
    %25 = arith.maximumf %24, %23 : vector<16x16xf32>
    %26 = vector.broadcast %cst_18 : f32 to vector<16x16xf32>
    %27 = arith.minimumf %26, %25 : vector<16x16xf32>
    %cst_19 = arith.constant 0.166666672 : f32
    %28 = vector.broadcast %cst_19 : f32 to vector<16x16xf32>
    %29 = arith.mulf %27, %28 : vector<16x16xf32>
    %30 = arith.mulf %21, %29 : vector<16x16xf32>
    %c0_20 = arith.constant 0 : index
    %c0_21 = arith.constant 0 : index
    %31 = vector.load %arg4[%c0_20, %c0_21] : memref<8x16xf32, #tpu.memory_space<vmem>>, vector<8x16xf32>
    %cst_22 = arith.constant dense<0.000000e+00> : vector<8x16xf32>
    %32 = tpu.matmul %31, %18, %cst_22 {dimension_numbers = #tpu.dot_dimension_numbers<[1], [0], [0], [1], [0, 0, 1, 1], [], []>} : vector<8x16xf32>, vector<16x16xf32>, vector<8x16xf32> -> vector<8x16xf32>
    %c0_23 = arith.constant 0 : index
    %c0_24 = arith.constant 0 : index
    %33 = vector.load %arg5[%c0_23, %c0_24] : memref<8x1xf32, #tpu.memory_space<vmem>>, vector<8x1xf32>
    %34 = vector.broadcast %33 : vector<8x1xf32> to vector<8x16xf32>
    %35 = arith.addf %32, %34 : vector<8x16xf32>
    %36 = arith.negf %35 : vector<8x16xf32>
    %37 = math.exp %36 : vector<8x16xf32>
    %cst_25 = arith.constant 1.000000e+00 : f32
    %38 = vector.broadcast %cst_25 : f32 to vector<8x16xf32>
    %39 = arith.addf %38, %37 : vector<8x16xf32>
    %40 = arith.divf %38, %39 : vector<8x16xf32>
    %c0_26 = arith.constant 0 : index
    %c0_27 = arith.constant 0 : index
    %41 = vector.load %arg6[%c0_26, %c0_27] : memref<8x16xf32, #tpu.memory_space<vmem>>, vector<8x16xf32>
    %cst_28 = arith.constant dense<0.000000e+00> : vector<8x16xf32>
    %42 = tpu.matmul %41, %30, %cst_28 {dimension_numbers = #tpu.dot_dimension_numbers<[1], [0], [0], [1], [0, 0, 1, 1], [], []>} : vector<8x16xf32>, vector<16x16xf32>, vector<8x16xf32> -> vector<8x16xf32>
    %c0_29 = arith.constant 0 : index
    %c0_30 = arith.constant 0 : index
    %43 = vector.load %arg7[%c0_29, %c0_30] : memref<8x1xf32, #tpu.memory_space<vmem>>, vector<8x1xf32>
    %44 = vector.broadcast %43 : vector<8x1xf32> to vector<8x16xf32>
    %45 = arith.addf %42, %44 : vector<8x16xf32>
    %46 = arith.negf %45 : vector<8x16xf32>
    %47 = math.exp %46 : vector<8x16xf32>
    %cst_31 = arith.constant 1.000000e+00 : f32
    %48 = vector.broadcast %cst_31 : f32 to vector<8x16xf32>
    %49 = arith.addf %48, %47 : vector<8x16xf32>
    %50 = arith.divf %48, %49 : vector<8x16xf32>
    %c0_32 = arith.constant 0 : index
    %c0_33 = arith.constant 0 : index
    %51 = vector.load %arg10[%c0_32, %c0_33] : memref<16x256xf32, #tpu.memory_space<vmem>>, vector<16x256xf32>
    %cst_34 = arith.constant dense<0.000000e+00> : vector<8x256xf32>
    %52 = tpu.matmul %40, %51, %cst_34 {dimension_numbers = #tpu.dot_dimension_numbers<[1], [0], [0], [1], [0, 0, 1, 1], [], []>} : vector<8x16xf32>, vector<16x256xf32>, vector<8x256xf32> -> vector<8x256xf32>
    %c0_35 = arith.constant 0 : index
    %c0_36 = arith.constant 0 : index
    %53 = vector.load %arg11[%c0_35, %c0_36] : memref<16x256xf32, #tpu.memory_space<vmem>>, vector<16x256xf32>
    %cst_37 = arith.constant dense<0.000000e+00> : vector<8x256xf32>
    %54 = tpu.matmul %50, %53, %cst_37 {dimension_numbers = #tpu.dot_dimension_numbers<[1], [0], [0], [1], [0, 0, 1, 1], [], []>} : vector<8x16xf32>, vector<16x256xf32>, vector<8x256xf32> -> vector<8x256xf32>
    %55 = arith.mulf %52, %54 : vector<8x256xf32>
    %56 = arith.mulf %0, %55 : vector<8x256xf32>
    %c0_38 = arith.constant 0 : index
    %c0_39 = arith.constant 0 : index
    %57 = vector.load %arg12[%c0_38, %c0_39] : memref<8x256xf32, #tpu.memory_space<vmem>>, vector<8x256xf32>
    tpu.vector_store %arg12[%c0_38, %c0_39], %56 {strides = array<i32>} : memref<8x256xf32, #tpu.memory_space<vmem>>, vector<8x256xf32>,
    return
  }
  func.func @transform_0(%arg0: i32) -> (i32, i32) {
    %c0_i32 = arith.constant 0 : i32
    %c0_i32_0 = arith.constant 0 : i32
    return %arg0, %c0_i32 : i32, i32
  }
  func.func @transform_1(%arg0: i32) -> (i32, i32) {
    %c0_i32 = arith.constant 0 : i32
    %c0_i32_0 = arith.constant 0 : i32
    %c0_i32_1 = arith.constant 0 : i32
    return %c0_i32, %c0_i32_0 : i32, i32
  }
  func.func @transform_2(%arg0: i32) -> (i32, i32) {
    %c0_i32 = arith.constant 0 : i32
    %c0_i32_0 = arith.constant 0 : i32
    %c0_i32_1 = arith.constant 0 : i32
    return %c0_i32, %c0_i32_0 : i32, i32
  }
  func.func @transform_3(%arg0: i32) -> (i32, i32) {
    %c0_i32 = arith.constant 0 : i32
    %c0_i32_0 = arith.constant 0 : i32
    %c0_i32_1 = arith.constant 0 : i32
    return %c0_i32, %c0_i32_0 : i32, i32
  }
  func.func @transform_4(%arg0: i32) -> (i32, i32) {
    %c0_i32 = arith.constant 0 : i32
    %c0_i32_0 = arith.constant 0 : i32
    %c0_i32_1 = arith.constant 0 : i32
    return %c0_i32, %c0_i32_0 : i32, i32
  }
  func.func @transform_5(%arg0: i32) -> (i32, i32) {
    %c0_i32 = arith.constant 0 : i32
    %c0_i32_0 = arith.constant 0 : i32
    %c0_i32_1 = arith.constant 0 : i32
    return %c0_i32, %c0_i32_0 : i32, i32
  }
  func.func @transform_6(%arg0: i32) -> (i32, i32) {
    %c0_i32 = arith.constant 0 : i32
    %c0_i32_0 = arith.constant 0 : i32
    %c0_i32_1 = arith.constant 0 : i32
    return %c0_i32, %c0_i32_0 : i32, i32
  }
  func.func @transform_7(%arg0: i32) -> (i32, i32) {
    %c0_i32 = arith.constant 0 : i32
    %c0_i32_0 = arith.constant 0 : i32
    %c0_i32_1 = arith.constant 0 : i32
    return %c0_i32, %c0_i32_0 : i32, i32
  }
  func.func @transform_8(%arg0: i32) -> (i32, i32) {
    %c0_i32 = arith.constant 0 : i32
    %c0_i32_0 = arith.constant 0 : i32
    %c0_i32_1 = arith.constant 0 : i32
    return %c0_i32, %c0_i32_0 : i32, i32
  }
  func.func @transform_9(%arg0: i32) -> (i32, i32) {
    %c0_i32 = arith.constant 0 : i32
    %c0_i32_0 = arith.constant 0 : i32
    %c0_i32_1 = arith.constant 0 : i32
    return %c0_i32, %c0_i32_0 : i32, i32
  }
  func.func @transform_10(%arg0: i32) -> (i32, i32) {
    %c0_i32 = arith.constant 0 : i32
    %c0_i32_0 = arith.constant 0 : i32
    %c0_i32_1 = arith.constant 0 : i32
    return %c0_i32, %c0_i32_0 : i32, i32
  }
  func.func @transform_11(%arg0: i32) -> (i32, i32) {
    %c0_i32 = arith.constant 0 : i32
    %c0_i32_0 = arith.constant 0 : i32
    return %arg0, %c0_i32 : i32, i32
  }
}

</mosaic_0001>

<llo_original>
// kernel: tpu_custom_call.1
$region0: #{tpu_custom_call.1}
  #allocation0 [shape = 'u32[]', space=smem, size = 0x4, offset = 0x4, fixed_abs, tag = 'smem constant byte address 0x4 - core index']
  #allocation1 [shape = 'u32[72,128]{1,0:T(1,128)}', space=vmem, size = 0x9000, scoped, tag = 'internal scratch']
  %s0 = inlined_call_operand.vmem [shape: f32[8,256], index: 0, kind: input, shape index: {}]
  %s1 = inlined_call_operand.vmem [shape: f32[16,8], index: 1, kind: input, shape index: {}]
  %s2 = inlined_call_operand.vmem [shape: f32[16,1], index: 2, kind: input, shape index: {}]
  %s3 = inlined_call_operand.vmem [shape: f32[8,16], index: 3, kind: input, shape index: {}]
  %s4 = inlined_call_operand.vmem [shape: f32[8,1], index: 4, kind: input, shape index: {}]
  %s5 = inlined_call_operand.vmem [shape: f32[8,16], index: 5, kind: input, shape index: {}]
  %s6 = inlined_call_operand.vmem [shape: f32[8,1], index: 6, kind: input, shape index: {}]
  %s7 = inlined_call_operand.vmem [shape: f32[256,16], index: 7, kind: input, shape index: {}]
  %s8 = inlined_call_operand.vmem [shape: f32[256,16], index: 8, kind: input, shape index: {}]
  %s9 = inlined_call_operand.vmem [shape: f32[16,256], index: 9, kind: input, shape index: {}]
  %s10 = inlined_call_operand.vmem [shape: f32[16,256], index: 10, kind: input, shape index: {}]
  %s11 = inlined_call_operand.hbm [shape: f32[8,256], index: 11, kind: output, shape index: {}]
  %s12 = sld [smem:[#allocation0]]
  $region54: #{tpu_custom_call.1} parent=0
    _
  %s14 = ssub.s32 1, %s12
  %s15 = scalar_select 0, %s14, %s12
  $region1: #{tpu_custom_call.1} parent=0
    #allocation2 [shape = 'u8[8192]{0}', space=vmem, size = 0x2000, scoped, tag = 'output window, operand 0, single buffered']
    #allocation3 [shape = 's32[1]{0}', space=sflag, size = 0x4, scoped, tag = 'scoped memory for tpu_custom_call.1']
    %16 = vsyncpa [#allocation3], 0
    // Predicated region
    $region2: #{tpu_custom_call.1} parent=1 // pred_check
      _
    $region3: #{tpu_custom_call.1} parent=1 // pred_check_branch
      %18 = sbr.rel (0) target = $region5
    $region4: #{tpu_custom_call.1} parent=1 // pred_region
      _
    $region5: #{tpu_custom_call.1} parent=1 // pred_fallthru
      _
    // Predicated region
    $region6: #{tpu_custom_call.1} parent=1 // pred_check
      _
    $region7: #{tpu_custom_call.1} parent=1 // pred_check_branch
      %20 = sbr.rel (0) target = $region9
    $region8: #{tpu_custom_call.1} parent=1 // pred_region
      _
    $region9: #{tpu_custom_call.1} parent=1 // pred_fallthru
      _
    // Predicated region
    $region10: #{tpu_custom_call.1} parent=1 // pred_check
      _
    $region11: #{tpu_custom_call.1} parent=1 // pred_check_branch
      %22 = sbr.rel (0) target = $region13
    $region12: #{tpu_custom_call.1} parent=1 // pred_region
      _
    $region13: #{tpu_custom_call.1} parent=1 // pred_fallthru
      _
    // Predicated region
    $region14: #{tpu_custom_call.1} parent=1 // pred_check
      _
    $region15: #{tpu_custom_call.1} parent=1 // pred_check_branch
      %24 = sbr.rel (0) target = $region17
    $region16: #{tpu_custom_call.1} parent=1 // pred_region
      _
    $region17: #{tpu_custom_call.1} parent=1 // pred_fallthru
      _
    // Predicated region
    $region18: #{tpu_custom_call.1} parent=1 // pred_check
      _
    $region19: #{tpu_custom_call.1} parent=1 // pred_check_branch
      %26 = sbr.rel (0) target = $region21
    $region20: #{tpu_custom_call.1} parent=1 // pred_region
      _
    $region21: #{tpu_custom_call.1} parent=1 // pred_fallthru
      _
    // Predicated region
    $region22: #{tpu_custom_call.1} parent=1 // pred_check
      _
    $region23: #{tpu_custom_call.1} parent=1 // pred_check_branch
      %28 = sbr.rel (0) target = $region25
    $region24: #{tpu_custom_call.1} parent=1 // pred_region
      _
    $region25: #{tpu_custom_call.1} parent=1 // pred_fallthru
      _
    // Predicated region
    $region26: #{tpu_custom_call.1} parent=1 // pred_check
      _
    $region27: #{tpu_custom_call.1} parent=1 // pred_check_branch
      %30 = sbr.rel (0) target = $region29
    $region28: #{tpu_custom_call.1} parent=1 // pred_region
      _
    $region29: #{tpu_custom_call.1} parent=1 // pred_fallthru
      _
    // Predicated region
    $region30: #{tpu_custom_call.1} parent=1 // pred_check
      _
    $region31: #{tpu_custom_call.1} parent=1 // pred_check_branch
      %32 = sbr.rel (0) target = $region33
    $region32: #{tpu_custom_call.1} parent=1 // pred_region
      _
    $region33: #{tpu_custom_call.1} parent=1 // pred_fallthru
      _
    // Predicated region
    $region34: #{tpu_custom_call.1} parent=1 // pred_check
      _
    $region35: #{tpu_custom_call.1} parent=1 // pred_check_branch
      %34 = sbr.rel (0) target = $region37
    $region36: #{tpu_custom_call.1} parent=1 // pred_region
      _
    $region37: #{tpu_custom_call.1} parent=1 // pred_fallthru
      _
    // Predicated region
    $region38: #{tpu_custom_call.1} parent=1 // pred_check
      _
    $region39: #{tpu_custom_call.1} parent=1 // pred_check_branch
      %36 = sbr.rel (0) target = $region41
    $region40: #{tpu_custom_call.1} parent=1 // pred_region
      _
    $region41: #{tpu_custom_call.1} parent=1 // pred_fallthru
      _
    // Predicated region
    $region42: #{tpu_custom_call.1} parent=1 // pred_check
      _
    $region43: #{tpu_custom_call.1} parent=1 // pred_check_branch
      %38 = sbr.rel (0) target = $region45
    $region44: #{tpu_custom_call.1} parent=1 // pred_region
      _
    $region45: #{tpu_custom_call.1} parent=1 // pred_fallthru
      _
    %v39 = vld [vmem:[%s0] sm:$0xff]
    %v40 = vld [vmem:[%s0 + $0x8] sm:$0xff]
    %v41 = vld [vmem:[%s7] sm:$0xff]
    %v42 = vld [vmem:[%s7 + $0x8] sm:$0xff]
    %v43 = vld [vmem:[%s7 + $0x10] sm:$0xff]
    %v44 = vld [vmem:[%s7 + $0x18] sm:$0xff]
    %v45 = vld [vmem:[%s7 + $0x20] sm:$0xff]
    %v46 = vld [vmem:[%s7 + $0x28] sm:$0xff]
    %v47 = vld [vmem:[%s7 + $0x30] sm:$0xff]
    %v48 = vld [vmem:[%s7 + $0x38] sm:$0xff]
    %v49 = vld [vmem:[%s7 + $0x40] sm:$0xff]
    %v50 = vld [vmem:[%s7 + $0x48] sm:$0xff]
    %v51 = vld [vmem:[%s7 + $0x50] sm:$0xff]
    %v52 = vld [vmem:[%s7 + $0x58] sm:$0xff]
    %v53 = vld [vmem:[%s7 + $0x60] sm:$0xff]
    %v54 = vld [vmem:[%s7 + $0x68] sm:$0xff]
    %v55 = vld [vmem:[%s7 + $0x70] sm:$0xff]
    %v56 = vld [vmem:[%s7 + $0x78] sm:$0xff]
    %v57 = vld [vmem:[%s7 + $0x80] sm:$0xff]
    %v58 = vld [vmem:[%s7 + $0x88] sm:$0xff]
    %v59 = vld [vmem:[%s7 + $0x90] sm:$0xff]
    %v60 = vld [vmem:[%s7 + $0x98] sm:$0xff]
    %v61 = vld [vmem:[%s7 + $0xa0] sm:$0xff]
    %v62 = vld [vmem:[%s7 + $0xa8] sm:$0xff]
    %v63 = vld [vmem:[%s7 + $0xb0] sm:$0xff]
    %v64 = vld [vmem:[%s7 + $0xb8] sm:$0xff]
    %v65 = vld [vmem:[%s7 + $0xc0] sm:$0xff]
    %v66 = vld [vmem:[%s7 + $0xc8] sm:$0xff]
    %v67 = vld [vmem:[%s7 + $0xd0] sm:$0xff]
    %v68 = vld [vmem:[%s7 + $0xd8] sm:$0xff]
    %v69 = vld [vmem:[%s7 + $0xe0] sm:$0xff]
    %v70 = vld [vmem:[%s7 + $0xe8] sm:$0xff]
    %v71 = vld [vmem:[%s7 + $0xf0] sm:$0xff]
    %v72 = vld [vmem:[%s7 + $0xf8] sm:$0xff]
    %73 = vmatpush.msra.mxu0 %v56
    %74 = vmatpush.msra.mxu0 %v55
    %75 = vmatpush.msra.mxu0 %v54
    %76 = vmatpush.msra.mxu0 %v53
    %77 = vmatpush.msra.mxu0 %v52
    %78 = vmatpush.msra.mxu0 %v51
    %79 = vmatpush.msra.mxu0 %v50
    %80 = vmatpush.msra.mxu0 %v49
    %81 = vmatpush.msra.mxu0 %v48
    %82 = vmatpush.msra.mxu0 %v47
    %83 = vmatpush.msra.mxu0 %v46
    %84 = vmatpush.msra.mxu0 %v45
    %85 = vmatpush.msra.mxu0 %v44
    %86 = vmatpush.msra.mxu0 %v43
    %87 = vmatpush.msra.mxu0 %v42
    %88 = vmatpush.msra.mxu0 %v41
    %89 = vmatmul.f32.gmra.mxu0 %v39
    %v90 = vpop.f32.mrf.mxu0
    %v91 = vadd.f32 0.0, %v90
    %92 = vdwg.mxu0
    %93 = vmatpush.msra.mxu0 %v72
    %94 = vmatpush.msra.mxu0 %v71
    %95 = vmatpush.msra.mxu0 %v70
    %96 = vmatpush.msra.mxu0 %v69
    %97 = vmatpush.msra.mxu0 %v68
    %98 = vmatpush.msra.mxu0 %v67
    %99 = vmatpush.msra.mxu0 %v66
    %100 = vmatpush.msra.mxu0 %v65
    %101 = vmatpush.msra.mxu0 %v64
    %102 = vmatpush.msra.mxu0 %v63
    %103 = vmatpush.msra.mxu0 %v62
    %104 = vmatpush.msra.mxu0 %v61
    %105 = vmatpush.msra.mxu0 %v60
    %106 = vmatpush.msra.mxu0 %v59
    %107 = vmatpush.msra.mxu0 %v58
    %108 = vmatpush.msra.mxu0 %v57
    %109 = vmatmul.f32.gmra.mxu0 %v40
    %v110 = vpop.f32.mrf.mxu0
    %v111 = vadd.f32 %v91, %v110
    %112 = vdwg.mxu0
    %v113 = vld [vmem:[%s8] sm:$0xff]
    %v114 = vld [vmem:[%s8 + $0x8] sm:$0xff]
    %v115 = vld [vmem:[%s8 + $0x10] sm:$0xff]
    %v116 = vld [vmem:[%s8 + $0x18] sm:$0xff]
    %v117 = vld [vmem:[%s8 + $0x20] sm:$0xff]
    %v118 = vld [vmem:[%s8 + $0x28] sm:$0xff]
    %v119 = vld [vmem:[%s8 + $0x30] sm:$0xff]
    %v120 = vld [vmem:[%s8 + $0x38] sm:$0xff]
    %v121 = vld [vmem:[%s8 + $0x40] sm:$0xff]
    %v122 = vld [vmem:[%s8 + $0x48] sm:$0xff]
    %v123 = vld [vmem:[%s8 + $0x50] sm:$0xff]
    %v124 = vld [vmem:[%s8 + $0x58] sm:$0xff]
    %v125 = vld [vmem:[%s8 + $0x60] sm:$0xff]
    %v126 = vld [vmem:[%s8 + $0x68] sm:$0xff]
    %v127 = vld [vmem:[%s8 + $0x70] sm:$0xff]
    %v128 = vld [vmem:[%s8 + $0x78] sm:$0xff]
    %v129 = vld [vmem:[%s8 + $0x80] sm:$0xff]
    %v130 = vld [vmem:[%s8 + $0x88] sm:$0xff]
    %v131 = vld [vmem:[%s8 + $0x90] sm:$0xff]
    %v132 = vld [vmem:[%s8 + $0x98] sm:$0xff]
    %v133 = vld [vmem:[%s8 + $0xa0] sm:$0xff]
    %v134 = vld [vmem:[%s8 + $0xa8] sm:$0xff]
    %v135 = vld [vmem:[%s8 + $0xb0] sm:$0xff]
    %v136 = vld [vmem:[%s8 + $0xb8] sm:$0xff]
    %v137 = vld [vmem:[%s8 + $0xc0] sm:$0xff]
    %v138 = vld [vmem:[%s8 + $0xc8] sm:$0xff]
    %v139 = vld [vmem:[%s8 + $0xd0] sm:$0xff]
    %v140 = vld [vmem:[%s8 + $0xd8] sm:$0xff]
    %v141 = vld [vmem:[%s8 + $0xe0] sm:$0xff]
    %v142 = vld [vmem:[%s8 + $0xe8] sm:$0xff]
    %v143 = vld [vmem:[%s8 + $0xf0] sm:$0xff]
    %v144 = vld [vmem:[%s8 + $0xf8] sm:$0xff]
    %145 = vmatpush.msra.mxu0 %v128
    %146 = vmatpush.msra.mxu0 %v127
    %147 = vmatpush.msra.mxu0 %v126
    %148 = vmatpush.msra.mxu0 %v125
    %149 = vmatpush.msra.mxu0 %v124
    %150 = vmatpush.msra.mxu0 %v123
    %151 = vmatpush.msra.mxu0 %v122
    %152 = vmatpush.msra.mxu0 %v121
    %153 = vmatpush.msra.mxu0 %v120
    %154 = vmatpush.msra.mxu0 %v119
    %155 = vmatpush.msra.mxu0 %v118
    %156 = vmatpush.msra.mxu0 %v117
    %157 = vmatpush.msra.mxu0 %v116
    %158 = vmatpush.msra.mxu0 %v115
    %159 = vmatpush.msra.mxu0 %v114
    %160 = vmatpush.msra.mxu0 %v113
    %161 = vmatmul.f32.gmra.mxu0 %v39
    %v162 = vpop.f32.mrf.mxu0
    %v163 = vadd.f32 0.0, %v162
    %164 = vdwg.mxu0
    %165 = vmatpush.msra.mxu0 %v144
    %166 = vmatpush.msra.mxu0 %v143
    %167 = vmatpush.msra.mxu0 %v142
    %168 = vmatpush.msra.mxu0 %v141
    %169 = vmatpush.msra.mxu0 %v140
    %170 = vmatpush.msra.mxu0 %v139
    %171 = vmatpush.msra.mxu0 %v138
    %172 = vmatpush.msra.mxu0 %v137
    %173 = vmatpush.msra.mxu0 %v136
    %174 = vmatpush.msra.mxu0 %v135
    %175 = vmatpush.msra.mxu0 %v134
    %176 = vmatpush.msra.mxu0 %v133
    %177 = vmatpush.msra.mxu0 %v132
    %178 = vmatpush.msra.mxu0 %v131
    %179 = vmatpush.msra.mxu0 %v130
    %180 = vmatpush.msra.mxu0 %v129
    %181 = vmatmul.f32.gmra.mxu0 %v40
    %v182 = vpop.f32.mrf.mxu0
    %v183 = vadd.f32 %v163, %v182
    %184 = vdwg.mxu0
    %v185 = vld [vmem:[%s1] sm:$0xff]
    %v186 = vld [vmem:[%s1 + $0x8] sm:$0xff]
    %v187 = vld [vmem:[%s2] sm:$0xff]
    %v188 = vld [vmem:[%s2 + $0x8] sm:$0xff]
    %190 = vset.pattern.permute.xlu0 0
    %191 = vperm.xlu0 %190, %v187
    %v192 = vpop.permute.xlu0 %191
    %195 = vset.pattern.permute.xlu0 0
    %196 = vperm.xlu0 %195, %v188
    %v197 = vpop.permute.xlu0 %196
    %vm199 = vcmask 64512
    %v201 = vsel %vm199, %v185, 0
    %v204 = vsel %vm199, %v186, 0
    %206 = vmatpush.msra.mxu0 0.0
    %207 = vmatpush.msra.mxu0 0.0
    %208 = vmatpush.msra.mxu0 0.0
    %209 = vmatpush.msra.mxu0 0.0
    %210 = vmatpush.msra.mxu0 0.0
    %211 = vmatpush.msra.mxu0 0.0
    %212 = vmatpush.msra.mxu0 0.0
    %213 = vmatpush.msra.mxu0 0.0
    %214 = vmatpush.msra.mxu0 0.0
    %215 = vmatpush.msra.mxu0 0.0
    %216 = vmatpush.msra.mxu0 0.0
    %217 = vmatpush.msra.mxu0 0.0
    %218 = vmatpush.msra.mxu0 0.0
    %219 = vmatpush.msra.mxu0 0.0
    %220 = vmatpush.msra.mxu0 0.0
    %221 = vmatpush.msra.mxu0 %v111
    %222 = vmatmul.f32.gmra.mxu0 %v201
    %v223 = vpop.f32.mrf.mxu0
    %v224 = vadd.f32 %v192, %v223
    %225 = vmatmul.f32.gmra.mxu0 %v204
    %v226 = vpop.f32.mrf.mxu0
    %v227 = vadd.f32 %v197, %v226
    %228 = vdwg.mxu0
    %v229 = vadd.f32 %v224, 3.0
    %v230 = vadd.f32 %v227, 3.0
    %v231 = vmax.f32 %v229, 0.0
    %v232 = vmax.f32 %v230, 0.0
    %v233 = vmin.f32 %v231, 6.0
    %v234 = vmin.f32 %v232, 6.0
    %v235 = vmul.f32 %v233, 0.16666667
    %v236 = vmul.f32 %v234, 0.16666667
    %v237 = vmul.f32 %v224, %v235
    %v238 = vmul.f32 %v227, %v236
    %239 = vmatpush.msra.mxu0 0.0
    %240 = vmatpush.msra.mxu0 0.0
    %241 = vmatpush.msra.mxu0 0.0
    %242 = vmatpush.msra.mxu0 0.0
    %243 = vmatpush.msra.mxu0 0.0
    %244 = vmatpush.msra.mxu0 0.0
    %245 = vmatpush.msra.mxu0 0.0
    %246 = vmatpush.msra.mxu0 0.0
    %247 = vmatpush.msra.mxu0 0.0
    %248 = vmatpush.msra.mxu0 0.0
    %249 = vmatpush.msra.mxu0 0.0
    %250 = vmatpush.msra.mxu0 0.0
    %251 = vmatpush.msra.mxu0 0.0
    %252 = vmatpush.msra.mxu0 0.0
    %253 = vmatpush.msra.mxu0 0.0
    %254 = vmatpush.msra.mxu0 %v183
    %255 = vmatmul.f32.gmra.mxu0 %v201
    %v256 = vpop.f32.mrf.mxu0
    %v257 = vadd.f32 %v192, %v256
    %258 = vmatmul.f32.gmra.mxu0 %v204
    %v259 = vpop.f32.mrf.mxu0
    %v260 = vadd.f32 %v197, %v259
    %261 = vdwg.mxu0
    %v262 = vadd.f32 %v257, 3.0
    %v263 = vadd.f32 %v260, 3.0
    %v264 = vmax.f32 %v262, 0.0
    %v265 = vmax.f32 %v263, 0.0
    %v266 = vmin.f32 %v264, 6.0
    %v267 = vmin.f32 %v265, 6.0
    %v268 = vmul.f32 %v266, 0.16666667
    %v269 = vmul.f32 %v267, 0.16666667
    %v270 = vmul.f32 %v257, %v268
    %v271 = vmul.f32 %v260, %v269
    %v272 = vld [vmem:[%s3] sm:$0xff]
    %v273 = vld [vmem:[%s4] sm:$0xff]
    %275 = vset.pattern.permute.xlu0 0
    %276 = vperm.xlu0 %275, %v273
    %v277 = vpop.permute.xlu0 %276
    %vm279 = vcmask 130048
    %v281 = vsel %vm279, %v272, 0
    %283 = vmatpush.msra.mxu0 0.0
    %284 = vmatpush.msra.mxu0 0.0
    %285 = vmatpush.msra.mxu0 0.0
    %286 = vmatpush.msra.mxu0 0.0
    %287 = vmatpush.msra.mxu0 0.0
    %288 = vmatpush.msra.mxu0 0.0
    %289 = vmatpush.msra.mxu0 0.0
    %290 = vmatpush.msra.mxu0 0.0
    %291 = vmatpush.msra.mxu0 0.0
    %292 = vmatpush.msra.mxu0 0.0
    %293 = vmatpush.msra.mxu0 0.0
    %294 = vmatpush.msra.mxu0 0.0
    %295 = vmatpush.msra.mxu0 0.0
    %296 = vmatpush.msra.mxu0 0.0
    %297 = vmatpush.msra.mxu0 %v238
    %298 = vmatpush.msra.mxu0 %v237
    %299 = vmatmul.f32.gmra.mxu0 %v281
    %v300 = vpop.f32.mrf.mxu0
    %v301 = vadd.f32 %v277, %v300
    %302 = vdwg.mxu0
    %v303 = vxor.u32 %v301, 2147483648
    %v304 = vmul.f32 %v303, 1.442695
    %v305 = vpow.pop %v304
    %v306 = vadd.f32 %v305, 1.0
    %v307 = vrcp.pop %v306
    %v308 = vmul.f32 %v306, %v307
    %v309 = vsub.f32 1.0, %v308
    %v310 = vmul.f32 %v307, %v309
    %v311 = vadd.f32 %v307, %v310
    %vm312 = vweird.f32 %v306
    %vm313 = vweird.f32 %v307
    %vm314 = vmor %vm312, %vm313
    %v315 = vsel %vm314, %v307, %v311
    %v316 = vand.u32 2147483647, %v306
    %vm317 = vcmp.eq.f32.partialorder %v316, 8.507059e+37
    %v318 = vand.u32 %v306, 2147483648
    %v319 = vor.u32 1.1754944e-38, %v318
    %v320 = vsel %vm317, %v319, %v315
    %v321 = vmul.f32 1.0, %v320
    %v322 = vld [vmem:[%s5] sm:$0xff]
    %v323 = vld [vmem:[%s6] sm:$0xff]
    %325 = vset.pattern.permute.xlu0 0
    %326 = vperm.xlu0 %325, %v323
    %v327 = vpop.permute.xlu0 %326
    %v330 = vsel %vm279, %v322, 0
    %332 = vmatpush.msra.mxu0 0.0
    %333 = vmatpush.msra.mxu0 0.0
    %334 = vmatpush.msra.mxu0 0.0
    %335 = vmatpush.msra.mxu0 0.0
    %336 = vmatpush.msra.mxu0 0.0
    %337 = vmatpush.msra.mxu0 0.0
    %338 = vmatpush.msra.mxu0 0.0
    %339 = vmatpush.msra.mxu0 0.0
    %340 = vmatpush.msra.mxu0 0.0
    %341 = vmatpush.msra.mxu0 0.0
    %342 = vmatpush.msra.mxu0 0.0
    %343 = vmatpush.msra.mxu0 0.0
    %344 = vmatpush.msra.mxu0 0.0
    %345 = vmatpush.msra.mxu0 0.0
    %346 = vmatpush.msra.mxu0 %v271
    %347 = vmatpush.msra.mxu0 %v270
    %348 = vmatmul.f32.gmra.mxu0 %v330
    %v349 = vpop.f32.mrf.mxu0
    %v350 = vadd.f32 %v327, %v349
    %351 = vdwg.mxu0
    %v352 = vxor.u32 %v350, 2147483648
    %v353 = vmul.f32 %v352, 1.442695
    %v354 = vpow.pop %v353
    %v355 = vadd.f32 %v354, 1.0
    %v356 = vrcp.pop %v355
    %v357 = vmul.f32 %v355, %v356
    %v358 = vsub.f32 1.0, %v357
    %v359 = vmul.f32 %v356, %v358
    %v360 = vadd.f32 %v356, %v359
    %vm361 = vweird.f32 %v355
    %vm362 = vweird.f32 %v356
    %vm363 = vmor %vm361, %vm362
    %v364 = vsel %vm363, %v356, %v360
    %v365 = vand.u32 2147483647, %v355
    %vm366 = vcmp.eq.f32.partialorder %v365, 8.507059e+37
    %v367 = vand.u32 %v355, 2147483648
    %v368 = vor.u32 1.1754944e-38, %v367
    %v369 = vsel %vm366, %v368, %v364
    %v370 = vmul.f32 1.0, %v369
    %v371 = vld [vmem:[%s9] sm:$0xff]
    %v372 = vld [vmem:[%s9 + $0x8] sm:$0xff]
    %v373 = vld [vmem:[%s9 + $0x10] sm:$0xff]
    %v374 = vld [vmem:[%s9 + $0x18] sm:$0xff]
    %v376 = vsel %vm279, %v321, 0
    %378 = vmatpush.msra.mxu0 0.0
    %379 = vmatpush.msra.mxu0 0.0
    %380 = vmatpush.msra.mxu0 0.0
    %381 = vmatpush.msra.mxu0 0.0
    %382 = vmatpush.msra.mxu0 0.0
    %383 = vmatpush.msra.mxu0 0.0
    %384 = vmatpush.msra.mxu0 0.0
    %385 = vmatpush.msra.mxu0 0.0
    %386 = vmatpush.msra.mxu0 0.0
    %387 = vmatpush.msra.mxu0 0.0
    %388 = vmatpush.msra.mxu0 0.0
    %389 = vmatpush.msra.mxu0 0.0
    %390 = vmatpush.msra.mxu0 0.0
    %391 = vmatpush.msra.mxu0 0.0
    %392 = vmatpush.msra.mxu0 %v373
    %393 = vmatpush.msra.mxu0 %v371
    %394 = vmatmul.f32.gmra.mxu0 %v376
    %v395 = vpop.f32.mrf.mxu0
    %v396 = vadd.f32 0.0, %v395
    %397 = vdwg.mxu0
    %398 = vmatpush.msra.mxu0 0.0
    %399 = vmatpush.msra.mxu0 0.0
    %400 = vmatpush.msra.mxu0 0.0
    %401 = vmatpush.msra.mxu0 0.0
    %402 = vmatpush.msra.mxu0 0.0
    %403 = vmatpush.msra.mxu0 0.0
    %404 = vmatpush.msra.mxu0 0.0
    %405 = vmatpush.msra.mxu0 0.0
    %406 = vmatpush.msra.mxu0 0.0
    %407 = vmatpush.msra.mxu0 0.0
    %408 = vmatpush.msra.mxu0 0.0
    %409 = vmatpush.msra.mxu0 0.0
    %410 = vmatpush.msra.mxu0 0.0
    %411 = vmatpush.msra.mxu0 0.0
    %412 = vmatpush.msra.mxu0 %v374
    %413 = vmatpush.msra.mxu0 %v372
    %414 = vmatmul.f32.gmra.mxu0 %v376
    %v415 = vpop.f32.mrf.mxu0
    %v416 = vadd.f32 0.0, %v415
    %417 = vdwg.mxu0
    %v418 = vld [vmem:[%s10] sm:$0xff]
    %v419 = vld [vmem:[%s10 + $0x8] sm:$0xff]
    %v420 = vld [vmem:[%s10 + $0x10] sm:$0xff]
    %v421 = vld [vmem:[%s10 + $0x18] sm:$0xff]
    %v423 = vsel %vm279, %v370, 0
    %425 = vmatpush.msra.mxu0 0.0
    %426 = vmatpush.msra.mxu0 0.0
    %427 = vmatpush.msra.mxu0 0.0
    %428 = vmatpush.msra.mxu0 0.0
    %429 = vmatpush.msra.mxu0 0.0
    %430 = vmatpush.msra.mxu0 0.0
    %431 = vmatpush.msra.mxu0 0.0
    %432 = vmatpush.msra.mxu0 0.0
    %433 = vmatpush.msra.mxu0 0.0
    %434 = vmatpush.msra.mxu0 0.0
    %435 = vmatpush.msra.mxu0 0.0
    %436 = vmatpush.msra.mxu0 0.0
    %437 = vmatpush.msra.mxu0 0.0
    %438 = vmatpush.msra.mxu0 0.0
    %439 = vmatpush.msra.mxu0 %v420
    %440 = vmatpush.msra.mxu0 %v418
    %441 = vmatmul.f32.gmra.mxu0 %v423
    %v442 = vpop.f32.mrf.mxu0
    %v443 = vadd.f32 0.0, %v442
    %444 = vdwg.mxu0
    %445 = vmatpush.msra.mxu0 0.0
    %446 = vmatpush.msra.mxu0 0.0
    %447 = vmatpush.msra.mxu0 0.0
    %448 = vmatpush.msra.mxu0 0.0
    %449 = vmatpush.msra.mxu0 0.0
    %450 = vmatpush.msra.mxu0 0.0
    %451 = vmatpush.msra.mxu0 0.0
    %452 = vmatpush.msra.mxu0 0.0
    %453 = vmatpush.msra.mxu0 0.0
    %454 = vmatpush.msra.mxu0 0.0
    %455 = vmatpush.msra.mxu0 0.0
    %456 = vmatpush.msra.mxu0 0.0
    %457 = vmatpush.msra.mxu0 0.0
    %458 = vmatpush.msra.mxu0 0.0
    %459 = vmatpush.msra.mxu0 %v421
    %460 = vmatpush.msra.mxu0 %v419
    %461 = vmatmul.f32.gmra.mxu0 %v423
    %v462 = vpop.f32.mrf.mxu0
    %v463 = vadd.f32 0.0, %v462
    %464 = vdwg.mxu0
    %v465 = vmul.f32 %v396, %v443
    %v466 = vmul.f32 %v416, %v463
    %v467 = vmul.f32 %v39, %v465
    %v468 = vmul.f32 %v40, %v466
    %469 = vst [vmem:[#allocation2] sm:$0xff] %v467
    %470 = vst [vmem:[#allocation2 + $0x8] sm:$0xff] %v468
    // Predicated region
    $region46: #{tpu_custom_call.1} parent=1 // pred_check
      _
    $region47: #{tpu_custom_call.1} parent=1 // pred_check_branch
      %472 = sbr.rel (0) target = $region49
    $region48: #{tpu_custom_call.1} parent=1 // pred_region
      %474 = vsyncadd [#allocation3], 0
      %s476 = sshll.u32 [#allocation2], 4
      %s477 = int_to_ptr.vmem [resolvable:$true] %s476
      %s478 = sshll.u32 %s11, 4
      %s479 = int_to_ptr.hbm [resolvable:$true] %s478
      %481 = dma.vmem_to_hbm [thread:$0]  %s477, 256, %s479, [#allocation3]
    $region49: #{tpu_custom_call.1} parent=1 // pred_fallthru
      _
    // Predicated region
    $region50: #{tpu_custom_call.1} parent=1 // pred_check
      _
    $region51: #{tpu_custom_call.1} parent=1 // pred_check_branch
      %483 = sbr.rel (0) target = $region53
    $region52: #{tpu_custom_call.1} parent=1 // pred_region
      %485 = dma.done [#allocation3], 256
    $region53: #{tpu_custom_call.1} parent=1 // pred_fallthru
      _
    %486 = vsyncpa [#allocation3], 1

</llo_original>
